<compile_context>
chip_gen: v7x
topology: tpu7x:2x2x1
jax: 0.10.0
libtpu: 0.0.40
codegen_flags: <defaults>
</compile_context>

<pallas_src>
import functools

import jax
import jax.numpy as jnp
from jax.experimental import pallas as pl
from jax.experimental.pallas import tpu as pltpu


def _triplet_tile_kernel(diag_ref, a_ref, b_ref, out_sum_ref, *colmax_refs,
                         margin, max_violation, want_i2t, want_t2i, tm, batch,
                         mask_rows):
    """One row tile: scores = A_tile @ B.T, then both ranking-loss directions."""
    i = pl.program_id(0)
    row0 = i * tm

    a = a_ref[...]                                        # (tm, D) streamed tile of `im`
    b = b_ref[...]                                        # (B, D)  VMEM-resident `s`

    # Similarity tile on the MXU, f32 accumulate (computed ONCE, reused for both dirs).
    scores = jax.lax.dot_general(a, b, (((1,), (1,)), ((), ())),
                                 preferred_element_type=jnp.float32)  # (tm, B)

    n = scores.shape[1]
    zero = jnp.float32(0.0)
    m = jnp.float32(margin)

    # One full-size iota (columns) + one (tm, 1) iota (rows) -> eye / row-valid masks.
    col = jax.lax.broadcasted_iota(jnp.int32, (tm, n), 1)
    row_g = row0 + jax.lax.broadcasted_iota(jnp.int32, (tm, 1), 0)
    eye = col == row_g                                    # (tm, n)
    drop = eye
    if mask_rows:                                         # partial last tile (cdiv grid)
        drop = jnp.logical_or(drop, row_g >= batch)

    partial = zero

    if want_i2t:
        # Row diagonal extracted from the scores tile itself -> exact cancellation.
        diag_row = jnp.sum(jnp.where(eye, scores, zero), axis=-1, keepdims=True)
        cost_s = jnp.maximum(m + scores - diag_row, zero)
        cost_s = jnp.where(drop, zero, cost_s)
        if max_violation:
            partial = partial + jnp.sum(jnp.max(cost_s, axis=-1))
        else:
            partial = partial + jnp.sum(cost_s)

    if want_t2i:
        cost_im = jnp.maximum(m + scores - diag_ref[...], zero)   # (1, B) broadcast
        cost_im = jnp.where(drop, zero, cost_im)
        if max_violation:
            # Per-tile column max; tiles are combined (max) + summed in the wrapper.
            cm = jnp.max(cost_im, axis=0, keepdims=True)          # (1, n)
            colmax_refs[0][...] = cm.reshape(1, 1, n)
        else:
            partial = partial + jnp.sum(cost_im)

    # Lane-dense (1, 8, 128) partial block; the wrapper reads [:, 0, 0].
    out_sum_ref[...] = jnp.zeros_like(out_sum_ref) + partial


def triplet_loss(s, im, *, margin=0.0, direction="all", max_violation=False,
                 cost_style="sum", row_tile=None):
    """Pallas implementation of TripletLoss.forward(s, im) with measure='cosine'."""
    if direction not in ("i2t", "t2i", "all"):
        raise ValueError(f"unknown direction: {direction!r}")
    if cost_style not in ("sum", "mean"):
        raise ValueError(f"unknown cost_style: {cost_style!r}")
    assert s.shape == im.shape and s.ndim == 2
    B, D = im.shape
    want_i2t = direction in ("i2t", "all")
    want_t2i = direction in ("t2i", "all")
    need_colmax = want_t2i and max_violation

    # Row tile: full batch when it fits, else 256-row tiles (already saturates the
    # 128/256-wide MXU without inflating the double-buffered A tiles).
    if row_tile is not None:
        tm = int(row_tile)
        if tm != B and tm % 8 != 0:
            raise ValueError("row_tile must be a multiple of 8 (or equal the batch)")
    else:
        tm = B if B <= 256 else 256
    num_tiles = pl.cdiv(B, tm)
    mask_rows = (num_tiles * tm != B)

    # Full diagonal diag[g] = im[g].s[g]: exact f32 VPU mul+sum, computed once.
    diag = jnp.sum(im.astype(jnp.float32) * s.astype(jnp.float32),
                   axis=-1).reshape(1, B)

    kernel = functools.partial(
        _triplet_tile_kernel, margin=float(margin),
        max_violation=bool(max_violation), want_i2t=want_i2t, want_t2i=want_t2i,
        tm=tm, batch=B, mask_rows=mask_rows)

    out_shapes = [jax.ShapeDtypeStruct((num_tiles, 8, 128), jnp.float32)]
    out_specs = [pl.BlockSpec((1, 8, 128), lambda i: (i, 0, 0))]
    if need_colmax:
        out_shapes.append(jax.ShapeDtypeStruct((num_tiles, 1, B), jnp.float32))
        out_specs.append(pl.BlockSpec((1, 1, B), lambda i: (i, 0, 0)))

    itemsize = jnp.dtype(im.dtype).itemsize
    # Approximate VMEM footprint: resident rhs + double-buffered lhs tiles + diag +
    # per-step outputs + f32/int32 intermediates of the (tm, B) tile.
    approx_vmem = int(2 * B * D * itemsize
                      + 2 * tm * D * itemsize
                      + 2 * B * 4
                      + 8 * tm * B * 4
                      + 2 * (8 * 128 * 4 + (B * 4 if need_colmax else 0)))
    vmem_limit = None
    if approx_vmem > (30 << 20):
        vmem_limit = min(approx_vmem + (8 << 20), 112 << 20)

    cost_est = pl.CostEstimate(
        flops=2 * B * B * D,
        transcendentals=0,
        bytes_accessed=int(2 * B * D * itemsize + B * 4
                           + num_tiles * (8 * 128 * 4
                                          + (B * 4 if need_colmax else 0))))

    outs = pl.pallas_call(
        kernel,
        out_shape=tuple(out_shapes),
        grid=(num_tiles,),
        in_specs=[
            pl.BlockSpec((1, B), lambda i: (0, 0)),     # diag: tiny, VMEM resident
            pl.BlockSpec((tm, D), lambda i: (i, 0)),    # im: streamed row tiles
            pl.BlockSpec((B, D), lambda i: (0, 0)),     # s: VMEM resident
        ],
        out_specs=tuple(out_specs),
        compiler_params=pltpu.CompilerParams(
            dimension_semantics=("parallel",),          # distinct output blocks / tile
            vmem_limit_bytes=vmem_limit),
        cost_estimate=cost_est,
    )(diag, im, s)

    total = jnp.sum(outs[0][:, 0, 0])
    if need_colmax:
        total = total + jnp.sum(jnp.max(outs[1][:, 0, :], axis=0))

    if cost_style == "mean":
        total = total / jnp.float32(B if max_violation else B * B)
    return total


def _reference_triplet_loss(s, im, *, margin=0.0, direction="all",
                            max_violation=False, cost_style="sum"):
    """Pure-JAX mirror of the PyTorch forward (measure='cosine')."""
    scores = im.astype(jnp.float32) @ s.astype(jnp.float32).T
    B = scores.shape[0]
    diag = jnp.diag(scores).reshape(B, 1)
    eye = jnp.eye(B, dtype=bool)
    total = jnp.float32(0.0)
    if direction in ("i2t", "all"):
        cost_s = jnp.where(eye, 0.0, jnp.maximum(margin + scores - diag, 0.0))
        if max_violation:
            cost_s = jnp.max(cost_s, axis=1)
        total = total + (cost_s.sum() if cost_style == "sum" else cost_s.mean())
    if direction in ("t2i", "all"):
        cost_im = jnp.where(eye, 0.0, jnp.maximum(margin + scores - diag.T, 0.0))
        if max_violation:
            cost_im = jnp.max(cost_im, axis=0)
        total = total + (cost_im.sum() if cost_style == "sum" else cost_im.mean())
    return total


if __name__ == "__main__":
    key = jax.random.PRNGKey(0)
    k1, k2, k3, k4 = jax.random.split(key, 4)

    configs = [
        dict(margin=0.2, direction="all", max_violation=False, cost_style="sum"),
        dict(margin=0.2, direction="all", max_violation=True, cost_style="sum"),
        dict(margin=0.2, direction="all", max_violation=False, cost_style="mean"),
        dict(margin=0.1, direction="i2t", max_violation=False, cost_style="sum"),
        dict(margin=0.1, direction="t2i", max_violation=True, cost_style="mean"),
    ]

    # Case 1: small aligned batch — single-tile fast path and forced 2-tile streaming.
    B, D = 16, 32
    im = jax.random.normal(k1, (B, D), dtype=jnp.float32)
    s = jax.random.normal(k2, (B, D), dtype=jnp.float32)
    for cfg in configs:
        ref = _reference_triplet_loss(s, im, **cfg)
        for rt in (None, 8):
            out = jax.block_until_ready(triplet_loss(s, im, row_tile=rt, **cfg))
            assert jnp.allclose(out, ref, rtol=1e-4, atol=1e-3), \
                (cfg, rt, float(out), float(ref))

    # Case 2: ragged batch — exercises the cdiv grid + in-kernel row masking path.
    B2 = 20
    im2 = jax.random.normal(k3, (B2, D), dtype=jnp.float32)
    s2 = jax.random.normal(k4, (B2, D), dtype=jnp.float32)
    for cfg in configs:
        ref = _reference_triplet_loss(s2, im2, **cfg)
        out = jax.block_until_ready(triplet_loss(s2, im2, row_tile=8, **cfg))
        assert jnp.allclose(out, ref, rtol=1e-4, atol=1e-3), \
            (cfg, float(out), float(ref))

    print("KERNEL_OK")
</pallas_src>

<mosaic_0001>
module attributes {stable_mosaic.version = 11 : i64} {
  func.func @_triplet_tile_kernel(%arg0: i32, %arg1: memref<1x16xf32, #tpu.memory_space<vmem>>, %arg2: memref<16x32xf32, #tpu.memory_space<vmem>>, %arg3: memref<16x32xf32, #tpu.memory_space<vmem>>, %arg4: memref<1x8x128xf32, #tpu.memory_space<vmem>>) attributes {dimension_semantics = [#tpu.dimension_semantics<parallel>], iteration_bounds = array<i64: 1>, scalar_prefetch = 0 : i64, scratch_operands = 0 : i64, tpu.core_type = #tpu.core_type<tc>, window_params = [{pipeline_mode = #tpu.pipeline_mode<synchronous>, transform_indices = @transform_0, window_bounds = array<i64: 1, 16>}, {transform_indices = @transform_1, window_bounds = array<i64: 16, 32>}, {pipeline_mode = #tpu.pipeline_mode<synchronous>, transform_indices = @transform_2, window_bounds = array<i64: 16, 32>}, {transform_indices = @transform_3, window_bounds = array<i64: 1, 8, 128>}]} {
    %c16_i32 = arith.constant 16 : i32
    %0 = arith.muli %arg0, %c16_i32 : i32
    %c0 = arith.constant 0 : index
    %c0_0 = arith.constant 0 : index
    %1 = vector.load %arg2[%c0, %c0_0] : memref<16x32xf32, #tpu.memory_space<vmem>>, vector<16x32xf32>
    %c0_1 = arith.constant 0 : index
    %c0_2 = arith.constant 0 : index
    %2 = vector.load %arg3[%c0_1, %c0_2] : memref<16x32xf32, #tpu.memory_space<vmem>>, vector<16x32xf32>
    %cst = arith.constant dense<0.000000e+00> : vector<16x16xf32>
    %3 = tpu.matmul %1, %2, %cst {dimension_numbers = #tpu.dot_dimension_numbers<[1], [1], [0], [0], [0, 0, 1, 0], [], []>} : vector<16x32xf32>, vector<16x32xf32>, vector<16x16xf32> -> vector<16x16xf32>
    %4 = tpu.iota {dimensions = array<i32: 1>} : vector<16x16xi32>
    %5 = tpu.iota {dimensions = array<i32: 0>} : vector<16x1xi32>
    %6 = vector.broadcast %0 : i32 to vector<16x1xi32>
    %7 = arith.addi %6, %5 : vector<16x1xi32>
    %8 = vector.broadcast %7 : vector<16x1xi32> to vector<16x16xi32>
    %9 = arith.cmpi eq, %4, %8 : vector<16x16xi32>
    %cst_3 = arith.constant 0.000000e+00 : f32
    %10 = vector.broadcast %cst_3 : f32 to vector<16x16xf32>
    %11 = arith.select %9, %3, %10 : vector<16x16xi1>, vector<16x16xf32>
    %cst_4 = arith.constant dense<0.000000e+00> : vector<16xf32>
    %12 = vector.multi_reduction <add>, %11, %cst_4 [1] : vector<16x16xf32> to vector<16xf32>
    %13 = vector.shape_cast %12 : vector<16xf32> to vector<16x1xf32>
    %cst_5 = arith.constant 2.000000e-01 : f32
    %14 = vector.broadcast %cst_5 : f32 to vector<16x16xf32>
    %15 = arith.addf %14, %3 : vector<16x16xf32>
    %16 = vector.broadcast %13 : vector<16x1xf32> to vector<16x16xf32>
    %17 = arith.subf %15, %16 : vector<16x16xf32>
    %cst_6 = arith.constant 0.000000e+00 : f32
    %18 = vector.broadcast %cst_6 : f32 to vector<16x16xf32>
    %19 = arith.maximumf %17, %18 : vector<16x16xf32>
    %cst_7 = arith.constant 0.000000e+00 : f32
    %20 = vector.broadcast %cst_7 : f32 to vector<16x16xf32>
    %21 = arith.select %9, %20, %19 : vector<16x16xi1>, vector<16x16xf32>
    %22 = vector.shape_cast %21 : vector<16x16xf32> to vector<1x16x16xf32>
    %cst_8 = arith.constant dense<0.000000e+00> : vector<1xf32>
    %23 = vector.multi_reduction <add>, %22, %cst_8 [1, 2] : vector<1x16x16xf32> to vector<1xf32>
    %24 = vector.shape_cast %23 : vector<1xf32> to vector<1x1x1xf32>
    %25 = vector.extract %24[0, 0, 0] : f32 from vector<1x1x1xf32>
    %cst_9 = arith.constant 0.000000e+00 : f32
    %26 = arith.addf %cst_9, %25 : f32
    %cst_10 = arith.constant 2.000000e-01 : f32
    %27 = vector.broadcast %cst_10 : f32 to vector<16x16xf32>
    %28 = arith.addf %27, %3 : vector<16x16xf32>
    %c0_11 = arith.constant 0 : index
    %c0_12 = arith.constant 0 : index
    %29 = vector.load %arg1[%c0_11, %c0_12] : memref<1x16xf32, #tpu.memory_space<vmem>>, vector<1x16xf32>
    %30 = vector.broadcast %29 : vector<1x16xf32> to vector<16x16xf32>
    %31 = arith.subf %28, %30 : vector<16x16xf32>
    %cst_13 = arith.constant 0.000000e+00 : f32
    %32 = vector.broadcast %cst_13 : f32 to vector<16x16xf32>
    %33 = arith.maximumf %31, %32 : vector<16x16xf32>
    %cst_14 = arith.constant 0.000000e+00 : f32
    %34 = vector.broadcast %cst_14 : f32 to vector<16x16xf32>
    %35 = arith.select %9, %34, %33 : vector<16x16xi1>, vector<16x16xf32>
    %36 = vector.shape_cast %35 : vector<16x16xf32> to vector<1x16x16xf32>
    %cst_15 = arith.constant dense<0.000000e+00> : vector<1xf32>
    %37 = vector.multi_reduction <add>, %36, %cst_15 [1, 2] : vector<1x16x16xf32> to vector<1xf32>
    %38 = vector.shape_cast %37 : vector<1xf32> to vector<1x1x1xf32>
    %39 = vector.extract %38[0, 0, 0] : f32 from vector<1x1x1xf32>
    %40 = arith.addf %26, %39 : f32
    %cst_16 = arith.constant 0.000000e+00 : f32
    %41 = vector.broadcast %cst_16 : f32 to vector<1x8x128xf32>
    %42 = vector.broadcast %40 : f32 to vector<1x8x128xf32>
    %43 = arith.addf %41, %42 : vector<1x8x128xf32>
    %c0_17 = arith.constant 0 : index
    %c0_18 = arith.constant 0 : index
    %c0_19 = arith.constant 0 : index
    %44 = vector.load %arg4[%c0_17, %c0_18, %c0_19] : memref<1x8x128xf32, #tpu.memory_space<vmem>>, vector<1x8x128xf32>
    tpu.vector_store %arg4[%c0_17, %c0_18, %c0_19], %43 {strides = array<i32>} : memref<1x8x128xf32, #tpu.memory_space<vmem>>, vector<1x8x128xf32>,
    return
  }
  func.func @transform_0(%arg0: i32) -> (i32, i32) {
    %c0_i32 = arith.constant 0 : i32
    %c0_i32_0 = arith.constant 0 : i32
    %c0_i32_1 = arith.constant 0 : i32
    return %c0_i32, %c0_i32_0 : i32, i32
  }
  func.func @transform_1(%arg0: i32) -> (i32, i32) {
    %c0_i32 = arith.constant 0 : i32
    %c0_i32_0 = arith.constant 0 : i32
    return %arg0, %c0_i32 : i32, i32
  }
  func.func @transform_2(%arg0: i32) -> (i32, i32) {
    %c0_i32 = arith.constant 0 : i32
    %c0_i32_0 = arith.constant 0 : i32
    %c0_i32_1 = arith.constant 0 : i32
    return %c0_i32, %c0_i32_0 : i32, i32
  }
  func.func @transform_3(%arg0: i32) -> (i32, i32, i32) {
    %c0_i32 = arith.constant 0 : i32
    %c0_i32_0 = arith.constant 0 : i32
    %c0_i32_1 = arith.constant 0 : i32
    return %arg0, %c0_i32, %c0_i32_0 : i32, i32, i32
  }
}

</mosaic_0001>

<llo_original>
// kernel: tpu_custom_call.1
$region0: #{tpu_custom_call.1}
  #allocation0 [shape = 'u32[]', space=smem, size = 0x4, offset = 0x4, fixed_abs, tag = 'smem constant byte address 0x4 - core index']
  #allocation1 [shape = 'u32[144,128]{1,0:T(1,128)}', space=vmem, size = 0x12000, scoped, tag = 'internal scratch']
  %s0 = inlined_call_operand.hbm [shape: f32[1,16], index: 0, kind: input, shape index: {}]
  %s1 = inlined_call_operand.hbm [shape: f32[16,32], index: 1, kind: input, shape index: {}]
  %s2 = inlined_call_operand.hbm [shape: f32[16,32], index: 2, kind: input, shape index: {}]
  %s3 = inlined_call_operand.hbm [shape: f32[1,8,128], index: 3, kind: output, shape index: {}]
  %s4 = sld [smem:[#allocation0]]
  $region34: #{tpu_custom_call.1} parent=0
    _
  %s6 = ssub.s32 1, %s4
  %s7 = scalar_select 0, %s6, %s4
  $region1: #{tpu_custom_call.1} parent=0
    #allocation2 [shape = 'u8[512]{0}', space=vmem, size = 0x400, scoped, tag = 'input window, operand 0, single buffered']
    #allocation3 [shape = 's32[1]{0}', space=sflag, size = 0x4, scoped, tag = 'scoped memory for tpu_custom_call.1']
    #allocation4 [shape = 's32[1]{0}', space=sflag, size = 0x4, scoped, tag = 'scoped memory for tpu_custom_call.1']
    #allocation5 [shape = 'u8[8192]{0}', space=vmem, size = 0x2000, scoped, tag = 'input window, operand 1, single buffered']
    #allocation6 [shape = 's32[1]{0}', space=sflag, size = 0x4, scoped, tag = 'scoped memory for tpu_custom_call.1']
    #allocation7 [shape = 'u8[8192]{0}', space=vmem, size = 0x2000, scoped, tag = 'input window, operand 2, single buffered']
    #allocation8 [shape = 'u8[4096]{0}', space=vmem, size = 0x1000, scoped, tag = 'output window, operand 0, single buffered']
    %8 = vsyncpa [#allocation3], 0
    %9 = vsyncpa [#allocation6], 0
    %10 = vsyncpa [#allocation4], 0
    // Predicated region
    $region2: #{tpu_custom_call.1} parent=1 // pred_check
      _
    $region3: #{tpu_custom_call.1} parent=1 // pred_check_branch
      %12 = sbr.rel (0) target = $region5
    $region4: #{tpu_custom_call.1} parent=1 // pred_region
      %s14 = ssub.s32 16, 16
      %15 = vsyncadd [#allocation3], %s14
      %s17 = sshll.u32 [#allocation2], 4
      %s18 = int_to_ptr.vmem [resolvable:$true] %s17
      %20 = dma.hbm_to_vmem [thread:$0]  %s0, 16, %s18, [#allocation3]
    $region5: #{tpu_custom_call.1} parent=1 // pred_fallthru
      _
    // Predicated region
    $region6: #{tpu_custom_call.1} parent=1 // pred_check
      _
    $region7: #{tpu_custom_call.1} parent=1 // pred_check_branch
      %22 = sbr.rel (0) target = $region9
    $region8: #{tpu_custom_call.1} parent=1 // pred_region
      %s24 = ssub.s32 256, 256
      %25 = vsyncadd [#allocation6], %s24
      %s26 = sshll.u32 [#allocation5], 4
      %s27 = int_to_ptr.vmem [resolvable:$true] %s26
      %32 = dma.hbm_to_vmem [thread:$0]  %s1, 256, %s27, [#allocation6], 128, 128, 8
    $region9: #{tpu_custom_call.1} parent=1 // pred_fallthru
      _
    // Predicated region
    $region10: #{tpu_custom_call.1} parent=1 // pred_check
      _
    $region11: #{tpu_custom_call.1} parent=1 // pred_check_branch
      %34 = sbr.rel (0) target = $region13
    $region12: #{tpu_custom_call.1} parent=1 // pred_region
      %s36 = ssub.s32 256, 256
      %37 = vsyncadd [#allocation6], %s36
      %s38 = sshll.u32 [#allocation7], 4
      %s39 = int_to_ptr.vmem [resolvable:$true] %s38
      %44 = dma.hbm_to_vmem [thread:$0]  %s2, 256, %s39, [#allocation6], 128, 128, 8
    $region13: #{tpu_custom_call.1} parent=1 // pred_fallthru
      _
    // Predicated region
    $region14: #{tpu_custom_call.1} parent=1 // pred_check
      _
    $region15: #{tpu_custom_call.1} parent=1 // pred_check_branch
      %46 = sbr.rel (0) target = $region17
    $region16: #{tpu_custom_call.1} parent=1 // pred_region
      %47 = dma.done [#allocation3], 16
    $region17: #{tpu_custom_call.1} parent=1 // pred_fallthru
      _
    // Predicated region
    $region18: #{tpu_custom_call.1} parent=1 // pred_check
      _
    $region19: #{tpu_custom_call.1} parent=1 // pred_check_branch
      %49 = sbr.rel (0) target = $region21
    $region20: #{tpu_custom_call.1} parent=1 // pred_region
      %50 = dma.done [#allocation6], 256
    $region21: #{tpu_custom_call.1} parent=1 // pred_fallthru
      _
    // Predicated region
    $region22: #{tpu_custom_call.1} parent=1 // pred_check
      _
    $region23: #{tpu_custom_call.1} parent=1 // pred_check_branch
      %52 = sbr.rel (0) target = $region25
    $region24: #{tpu_custom_call.1} parent=1 // pred_region
      %53 = dma.done [#allocation6], 256
    $region25: #{tpu_custom_call.1} parent=1 // pred_fallthru
      _
    %s54 = smul.u32 0, 16
    %v55 = vld [vmem:[#allocation5] sm:$0xff]
    %v56 = vld [vmem:[#allocation5 + $0x8] sm:$0xff]
    %v57 = vld [vmem:[#allocation7] sm:$0xff]
    %v58 = vld [vmem:[#allocation7 + $0x8] sm:$0xff]
    %vm59 = vcmask 261120
    %v61 = vsel %vm59, %v55, 0
    %v64 = vsel %vm59, %v56, 0
    %v67 = vsel %vm59, %v57, 0
    %v70 = vsel %vm59, %v58, 0
    %72 = vmatprep.subr.mxu0 0.0
    %73 = vmatpush1.xpose.msra.mxu0 %v67
    %74 = vmatprep.subr.mxu0 0.0
    %75 = vmatpush1.xpose.msra.mxu0 %v70
    %76 = vmatprep.subr.mxu0 0.0
    %77 = vmatpush1.xpose.msra.mxu0 0.0
    %78 = vmatprep.subr.mxu0 0.0
    %79 = vmatpush1.xpose.msra.mxu0 0.0
    %80 = vmatprep.subr.mxu0 0.0
    %81 = vmatpush1.xpose.msra.mxu0 0.0
    %82 = vmatprep.subr.mxu0 0.0
    %83 = vmatpush1.xpose.msra.mxu0 0.0
    %84 = vmatprep.subr.mxu0 0.0
    %85 = vmatpush1.xpose.msra.mxu0 0.0
    %86 = vmatprep.subr.mxu0 0.0
    %87 = vmatpush1.xpose.msra.mxu0 0.0
    %88 = vmatprep.subr.mxu0 0.0
    %89 = vmatpush1.xpose.msra.mxu0 0.0
    %90 = vmatprep.subr.mxu0 0.0
    %91 = vmatpush1.xpose.msra.mxu0 0.0
    %92 = vmatprep.subr.mxu0 0.0
    %93 = vmatpush1.xpose.msra.mxu0 0.0
    %94 = vmatprep.subr.mxu0 0.0
    %95 = vmatpush1.xpose.msra.mxu0 0.0
    %96 = vmatprep.subr.mxu0 0.0
    %97 = vmatpush1.xpose.msra.mxu0 0.0
    %98 = vmatprep.subr.mxu0 0.0
    %99 = vmatpush1.xpose.msra.mxu0 0.0
    %100 = vmatprep.subr.mxu0 0.0
    %101 = vmatpush1.xpose.msra.mxu0 0.0
    %102 = vmatprep.subr.mxu0 0.0
    %103 = vmatpush1.xpose.msra.mxu0 0.0
    %104 = vmatprep.subr.mxu0 0.0
    %105 = vmatpush1.xpose.msra.mxu0 0.0
    %106 = vmatprep.subr.mxu0 0.0
    %107 = vmatpush1.xpose.msra.mxu0 0.0
    %108 = vmatprep.subr.mxu0 0.0
    %109 = vmatpush1.xpose.msra.mxu0 0.0
    %110 = vmatprep.subr.mxu0 0.0
    %111 = vmatpush1.xpose.msra.mxu0 0.0
    %112 = vmatprep.subr.mxu0 0.0
    %113 = vmatpush1.xpose.msra.mxu0 0.0
    %114 = vmatprep.subr.mxu0 0.0
    %115 = vmatpush1.xpose.msra.mxu0 0.0
    %116 = vmatprep.subr.mxu0 0.0
    %117 = vmatpush1.xpose.msra.mxu0 0.0
    %118 = vmatprep.subr.mxu0 0.0
    %119 = vmatpush1.xpose.msra.mxu0 0.0
    %120 = vmatprep.subr.mxu0 0.0
    %121 = vmatpush1.xpose.msra.mxu0 0.0
    %122 = vmatprep.subr.mxu0 0.0
    %123 = vmatpush1.xpose.msra.mxu0 0.0
    %124 = vmatprep.subr.mxu0 0.0
    %125 = vmatpush1.xpose.msra.mxu0 0.0
    %126 = vmatprep.subr.mxu0 0.0
    %127 = vmatpush1.xpose.msra.mxu0 0.0
    %128 = vmatprep.subr.mxu0 0.0
    %129 = vmatpush1.xpose.msra.mxu0 0.0
    %130 = vmatprep.subr.mxu0 0.0
    %131 = vmatpush1.xpose.msra.mxu0 0.0
    %132 = vmatprep.subr.mxu0 0.0
    %133 = vmatpush1.xpose.msra.mxu0 0.0
    %134 = vmatprep.subr.mxu0 0.0
    %135 = vmatpush1.xpose.msra.mxu0 0.0
    %136 = vmatprep.mubr.f32.mxu0 0.0
    %137 = vmatmul.mubr.f32.gmra.mrb[0].mxu0 %v61
    %v138 = vpop.f32.mrb[0].mxu0
    %v139 = vadd.f32 0.0, %v138
    %v140 = vpop.f32.mrb[0].mxu0
    %141 = vmatprep.mubr.f32.mxu0 0.0
    %142 = vmatmul.mubr.f32.gmra.mrb[0].mxu0 %v64
    %v143 = vpop.f32.mrb[0].mxu0
    %v144 = vadd.f32 0.0, %v143
    %v145 = vpop.f32.mrb[0].mxu0
    %146 = vdwg.mxu0
    %v147 = vlaneseq
    %v148 = vand.u32 %v147, 127
    %v149 = vlaneseq
    %v150 = vshrl.u32 %v149, 7
    %v151 = vadd.s32 %v150, 8
    %v152 = vstv %s54
    %v153 = vadd.s32 %v152, %v150
    %v154 = vadd.s32 %v152, %v151
    %vm155 = vcmp.eq.s32.totalorder %v148, %v153
    %vm156 = vcmp.eq.s32.totalorder %v148, %v154
    %v157 = vsel %vm155, %v139, 0.0
    %v158 = vsel %vm156, %v144, 0.0
    %vm159 = vcmask 130048
    %v160 = vsel %vm159, %v157, 0.0
    %161 = vadd.xlane.f32.xlu0 %v160
    %v162 = vpop.xlane.xlu0 %161
    %v163 = vsel %vm159, %v158, 0.0
    %164 = vadd.xlane.f32.xlu0 %v163
    %v165 = vpop.xlane.xlu0 %164
    %v166 = vadd.f32 %v139, 0.2
    %v167 = vadd.f32 %v144, 0.2
    %v168 = vsub.f32 %v166, %v162
    %v169 = vsub.f32 %v167, %v165
    %v170 = vmax.f32 %v168, 0.0
    %v171 = vmax.f32 %v169, 0.0
    %v172 = vsel %vm155, 0.0, %v170
    %v173 = vsel %vm156, 0.0, %v171
    %v174 = vsel %vm159, %v172, 0.0
    %v175 = vsel %vm159, %v173, 0.0
    %v176 = vadd.f32 %v174, %v175
    %177 = vadd.xlane.f32.xlu0 %v176
    %v178 = vpop.xlane.xlu0 %177
    %v179 = vrot.slane %v178, 4
    %v180 = vadd.f32 %v178, %v179
    %v181 = vrot.slane %v180, 2
    %v182 = vadd.f32 %v180, %v181
    %v183 = vrot.slane %v182, 1
    %v184 = vadd.f32 %v182, %v183
    %s185 = vtos %v184
    %s186 = sadd.f32 %s185, 0.0
    %v187 = vld [vmem:[#allocation2] sm:$0x1]
    %v189 = vlaneseq
    %v190 = vshrl.u32 %v189, 7
    %v191 = vsub.s32 0, %v190
    %v192 = vrot.slane %v187, %v191
    %v194 = vsub.f32 %v166, %v192
    %v195 = vsub.f32 %v167, %v192
    %v196 = vmax.f32 %v194, 0.0
    %v197 = vmax.f32 %v195, 0.0
    %v198 = vsel %vm155, 0.0, %v196
    %v199 = vsel %vm156, 0.0, %v197
    %v200 = vsel %vm159, %v198, 0.0
    %v201 = vsel %vm159, %v199, 0.0
    %v202 = vadd.f32 %v200, %v201
    %203 = vadd.xlane.f32.xlu0 %v202
    %v204 = vpop.xlane.xlu0 %203
    %v205 = vrot.slane %v204, 4
    %v206 = vadd.f32 %v204, %v205
    %v207 = vrot.slane %v206, 2
    %v208 = vadd.f32 %v206, %v207
    %v209 = vrot.slane %v208, 1
    %v210 = vadd.f32 %v208, %v209
    %s211 = vtos %v210
    %s212 = sadd.f32 %s186, %s211
    %v213 = vstv %s212
    %v214 = vadd.f32 %v213, 0.0
    %215 = vst [vmem:[#allocation8] sm:$0xff] %v214
    // Predicated region
    $region26: #{tpu_custom_call.1} parent=1 // pred_check
      _
    $region27: #{tpu_custom_call.1} parent=1 // pred_check_branch
      %217 = sbr.rel (0) target = $region29
    $region28: #{tpu_custom_call.1} parent=1 // pred_region
      %s219 = ssub.s32 128, 128
      %220 = vsyncadd [#allocation4], %s219
      %s222 = sshll.u32 [#allocation8], 4
      %s223 = int_to_ptr.vmem [resolvable:$true] %s222
      %225 = dma.vmem_to_hbm [thread:$0]  %s223, 128, %s3, [#allocation4]
    $region29: #{tpu_custom_call.1} parent=1 // pred_fallthru
      _
    // Predicated region
    $region30: #{tpu_custom_call.1} parent=1 // pred_check
      _
    $region31: #{tpu_custom_call.1} parent=1 // pred_check_branch
      %227 = sbr.rel (0) target = $region33
    $region32: #{tpu_custom_call.1} parent=1 // pred_region
      %228 = dma.done [#allocation4], 128
    $region33: #{tpu_custom_call.1} parent=1 // pred_fallthru
      _
    %229 = vsyncpa [#allocation3], 1
    %230 = vsyncpa [#allocation6], 1
    %231 = vsyncpa [#allocation4], 1

</llo_original>
